<compile_context>
chip_gen: v5e
topology: v5e:2x2
jax: 0.10.0
libtpu: 0.0.40
codegen_flags: <defaults>
</compile_context>

<pallas_src>
import math
from functools import partial

import jax
import jax.numpy as jnp
from jax.experimental import pallas as pl
from jax.experimental.pallas import tpu as pltpu


# --------------------------------------------------------------------------
# Helpers
# --------------------------------------------------------------------------
def _cdiv(a: int, b: int) -> int:
    return -(-a // b)


def _round_up(v: int, m: int) -> int:
    return _cdiv(v, m) * m


def _sublane(dtype) -> int:
    # Second-minor tile granularity by element size: f32 -> 8, bf16 -> 16,
    # int8/fp8 -> 32.
    return {4: 8, 2: 16, 1: 32}.get(jnp.dtype(dtype).itemsize, 8)


def _choose_tile(dim: int, max_tile: int, align: int) -> int:
    """Balanced tile: smallest aligned tile whose step count matches max_tile."""
    dim_aligned = _round_up(dim, align)
    if dim_aligned <= max_tile:
        return dim_aligned
    nsteps = _cdiv(dim_aligned, max_tile)
    return _round_up(_cdiv(dim_aligned, nsteps), align)


# --------------------------------------------------------------------------
# Kernels
# --------------------------------------------------------------------------
def _matmul_bias_kernel(bias_ref, x_ref, w_ref, o_ref, acc_ref):
    # bias_ref: (1,) f32 in SMEM (shared scalar bias, resident for the call)
    # x_ref:    (tm, tk) block of x          (M, Kp)
    # w_ref:    (tk, tn) block of W^T        (Kp, N)  -- pre-transposed once
    # o_ref:    (tm, tn) block of output     (M, N)
    # acc_ref:  (tm, tn) f32 accumulator scratch, resident across the K axis
    k = pl.program_id(2)

    @pl.when(k == 0)
    def _():
        acc_ref[...] = jnp.zeros_like(acc_ref)

    acc_ref[...] += jnp.dot(
        x_ref[...], w_ref[...], preferred_element_type=jnp.float32
    )

    @pl.when(k == pl.num_programs(2) - 1)
    def _():
        # Single epilogue bias add (shared scalar bias), then cast.
        o_ref[...] = (acc_ref[...] + bias_ref[0]).astype(o_ref.dtype)


def _resident_weight_kernel(bias_ref, x_ref, w_ref, o_ref):
    # Fast path: whole weight (K, N) resident in VMEM, 1-D grid over M tiles,
    # no K reduction axis and no accumulator read-modify-write.
    acc = jnp.dot(x_ref[...], w_ref[...], preferred_element_type=jnp.float32)
    o_ref[...] = (acc + bias_ref[0]).astype(o_ref.dtype)


# --------------------------------------------------------------------------
# Wrapper
# --------------------------------------------------------------------------
_SMALL_WEIGHT_BYTES = 2 * 1024 * 1024  # weight fully resident below this


@partial(
    jax.jit,
    static_argnames=("tm", "tn", "tk", "compute_dtype", "use_small_path"),
)
def shared_bias_linear(
    x,
    weight,
    bias,
    *,
    tm: int = 512,
    tn: int = 512,
    tk: int = 512,
    compute_dtype=None,
    use_small_path=None,
):
    """x: (M, K), weight: (N, K) (PyTorch layout), bias: (1,) shared scalar."""
    M, K = x.shape
    N, K2 = weight.shape
    assert K == K2, (K, K2)

    if compute_dtype is not None:
        x = x.astype(compute_dtype)
        weight = weight.astype(compute_dtype)

    out_dtype = x.dtype
    in_bytes = jnp.dtype(x.dtype).itemsize
    w_bytes = jnp.dtype(weight.dtype).itemsize
    out_bytes = jnp.dtype(out_dtype).itemsize

    bias32 = jnp.asarray(bias, dtype=jnp.float32).reshape((1,))
    bias_spec = pl.BlockSpec(memory_space=pltpu.MemorySpace.SMEM)

    sub_m = max(_sublane(x.dtype), _sublane(out_dtype))

    small_ok = (K * N * w_bytes) <= _SMALL_WEIGHT_BYTES and K <= 2048 and N <= 2048
    use_small = small_ok if use_small_path is None else bool(use_small_path)

    # ---------------------------------------------------------------------
    # Fast path: resident weight, 1-D grid over M, no K axis.
    # ---------------------------------------------------------------------
    if use_small:
        tm_f = _choose_tile(M, tm, sub_m)
        w_t = weight.T  # (K, N) -- one-time layout plumbing
        grid = (_cdiv(M, tm_f),)

        vmem_need = (
            2 * tm_f * K * in_bytes
            + 2 * K * N * w_bytes
            + 2 * tm_f * N * out_bytes
        )
        cost = pl.CostEstimate(
            flops=2 * M * N * K,
            bytes_accessed=M * K * in_bytes + K * N * w_bytes + M * N * out_bytes,
            transcendentals=0,
        )

        return pl.pallas_call(
            _resident_weight_kernel,
            out_shape=jax.ShapeDtypeStruct((M, N), out_dtype),
            grid_spec=pltpu.PrefetchScalarGridSpec(
                num_scalar_prefetch=0,
                grid=grid,
                in_specs=[
                    bias_spec,                                     # (1,) bias
                    pl.BlockSpec((tm_f, K), lambda i: (i, 0)),     # x tile
                    pl.BlockSpec((K, N), lambda i: (0, 0)),        # full W^T
                ],
                out_specs=pl.BlockSpec((tm_f, N), lambda i: (i, 0)),
            ),
            compiler_params=pltpu.CompilerParams(
                dimension_semantics=("parallel",),
                vmem_limit_bytes=max(32 * 1024 * 1024, int(vmem_need * 2)),
            ),
            cost_estimate=cost,
        )(bias32, x, w_t)

    # ---------------------------------------------------------------------
    # General path: (M, N, K) grid with resident f32 accumulator over K.
    # ---------------------------------------------------------------------
    tm_ = _choose_tile(M, tm, sub_m)
    tn_ = _choose_tile(N, tn, 128)

    # K must be zero-padded for reduction correctness; pick a balanced tk so
    # awkward K (e.g. 640) doesn't pad all the way to the next multiple of tk.
    kp_base = _round_up(K, 128)
    nk = _cdiv(kp_base, tk)
    tk_ = _round_up(_cdiv(kp_base, nk), 128)
    Kp = nk * tk_

    if Kp == K:
        x_p = x
        w_t = weight.T                                  # (K, N)
    else:
        x_p = jnp.pad(x, ((0, 0), (0, Kp - K)))
        w_t = jnp.pad(weight, ((0, 0), (0, Kp - K))).T  # (Kp, N)

    grid_m, grid_n = _cdiv(M, tm_), _cdiv(N, tn_)
    grid = (grid_m, grid_n, nk)

    vmem_need = (
        2 * tm_ * tk_ * in_bytes
        + 2 * tk_ * tn_ * w_bytes
        + 2 * tm_ * tn_ * out_bytes
        + tm_ * tn_ * 4
    )
    cost = pl.CostEstimate(
        flops=2 * M * N * K,
        bytes_accessed=(
            M * Kp * in_bytes * grid_n        # x re-read once per N tile
            + Kp * N * w_bytes * grid_m       # W re-read once per M tile
            + M * N * out_bytes
        ),
        transcendentals=0,
    )

    return pl.pallas_call(
        _matmul_bias_kernel,
        out_shape=jax.ShapeDtypeStruct((M, N), out_dtype),
        grid_spec=pltpu.PrefetchScalarGridSpec(
            num_scalar_prefetch=0,
            grid=grid,
            in_specs=[
                bias_spec,                                             # (1,) bias
                pl.BlockSpec((tm_, tk_), lambda i, j, k: (i, k)),      # x tile
                pl.BlockSpec((tk_, tn_), lambda i, j, k: (k, j)),      # W^T tile
            ],
            out_specs=pl.BlockSpec((tm_, tn_), lambda i, j, k: (i, j)),
            scratch_shapes=[pltpu.VMEM((tm_, tn_), jnp.float32)],
        ),
        compiler_params=pltpu.CompilerParams(
            dimension_semantics=("parallel", "parallel", "arbitrary"),
            vmem_limit_bytes=max(32 * 1024 * 1024, int(vmem_need * 3 // 2)),
        ),
        cost_estimate=cost,
    )(bias32, x_p, w_t)


def init_params(key, num_inputs, num_units, dtype=jnp.float32):
    # Mirrors SharedBiasLinear.reset_parameters: uniform(-1/sqrt(fan_in), +...)
    bound = math.sqrt(1.0 / num_inputs)
    k_w, k_b = jax.random.split(key)
    weight = jax.random.uniform(
        k_w, (num_units, num_inputs), dtype=dtype, minval=-bound, maxval=bound
    )
    bias = jax.random.uniform(k_b, (1,), dtype=dtype, minval=-bound, maxval=bound)
    return weight, bias


if __name__ == "__main__":
    key = jax.random.PRNGKey(0)

    # --- Check 1: module-sized small layer (f32) -> resident-weight fast path.
    batch, num_inputs, num_units = 8, 32, 64
    k_x, k_p, key = jax.random.split(key, 3)
    x = jax.random.normal(k_x, (batch, num_inputs), dtype=jnp.float32)
    weight, bias = init_params(k_p, num_inputs, num_units)

    out = jax.block_until_ready(shared_bias_linear(x, weight, bias))
    ref = x @ weight.T + bias[0]
    assert out.shape == (batch, num_units)
    assert jnp.allclose(out, ref, atol=1e-5, rtol=1e-5)

    # --- Check 2: 3-D grid with K reduction and ragged N (masked edge tiles).
    M2, K2, N2 = 256, 384, 200
    k_x2, k_p2, key = jax.random.split(key, 3)
    x2 = jax.random.normal(k_x2, (M2, K2), dtype=jnp.float32)
    weight2, bias2 = init_params(k_p2, K2, N2)

    out2 = jax.block_until_ready(
        shared_bias_linear(
            x2, weight2, bias2, tm=128, tn=128, tk=128, use_small_path=False
        )
    )
    ref2 = x2 @ weight2.T + bias2[0]
    assert out2.shape == (M2, N2)
    assert jnp.allclose(out2, ref2, atol=1e-4, rtol=1e-4)

    # --- Check 3: bf16 inputs on the grid path (dtype-aware tiling, f32 acc).
    M3, K3, N3 = 64, 256, 192
    k_x3, k_p3 = jax.random.split(key)
    x3 = jax.random.normal(k_x3, (M3, K3), dtype=jnp.float32).astype(jnp.bfloat16)
    weight3, bias3 = init_params(k_p3, K3, N3)
    weight3 = weight3.astype(jnp.bfloat16)

    out3 = jax.block_until_ready(
        shared_bias_linear(
            x3, weight3, bias3, tm=64, tn=128, tk=128, use_small_path=False
        )
    )
    ref3 = x3.astype(jnp.float32) @ weight3.astype(jnp.float32).T + bias3[0]
    assert out3.shape == (M3, N3)
    assert out3.dtype == jnp.bfloat16
    assert jnp.allclose(out3.astype(jnp.float32), ref3, atol=2e-2, rtol=2e-2)

    print("KERNEL_OK")
</pallas_src>

<mosaic_0001>
module attributes {stable_mosaic.version = 11 : i64} {
  func.func @_resident_weight_kernel(%arg0: i32, %arg1: memref<1xf32, #tpu.memory_space<smem>>, %arg2: memref<8x32xf32, #tpu.memory_space<vmem>>, %arg3: memref<32x64xf32, #tpu.memory_space<vmem>>, %arg4: memref<8x64xf32, #tpu.memory_space<vmem>>) attributes {dimension_semantics = [#tpu.dimension_semantics<parallel>], iteration_bounds = array<i64: 1>, scalar_prefetch = 0 : i64, scratch_operands = 0 : i64, tpu.core_type = #tpu.core_type<tc>, window_params = [{transform_indices = @transform_0, window_bounds = array<i64: 1>}, {transform_indices = @transform_1, window_bounds = array<i64: 8, 32>}, {pipeline_mode = #tpu.pipeline_mode<synchronous>, transform_indices = @transform_2, window_bounds = array<i64: 32, 64>}, {transform_indices = @transform_3, window_bounds = array<i64: 8, 64>}]} {
    %c0 = arith.constant 0 : index
    %c0_0 = arith.constant 0 : index
    %0 = vector.load %arg2[%c0, %c0_0] : memref<8x32xf32, #tpu.memory_space<vmem>>, vector<8x32xf32>
    %c0_1 = arith.constant 0 : index
    %c0_2 = arith.constant 0 : index
    %1 = vector.load %arg3[%c0_1, %c0_2] : memref<32x64xf32, #tpu.memory_space<vmem>>, vector<32x64xf32>
    %cst = arith.constant dense<0.000000e+00> : vector<8x64xf32>
    %2 = tpu.matmul %0, %1, %cst {dimension_numbers = #tpu.dot_dimension_numbers<[1], [0], [0], [1], [0, 0, 1, 1], [], []>} : vector<8x32xf32>, vector<32x64xf32>, vector<8x64xf32> -> vector<8x64xf32>
    %c0_3 = arith.constant 0 : index
    %3 = memref.load %arg1[%c0_3] : memref<1xf32, #tpu.memory_space<smem>>
    %4 = vector.broadcast %3 : f32 to vector<8x64xf32>
    %5 = arith.addf %2, %4 : vector<8x64xf32>
    %c0_4 = arith.constant 0 : index
    %c0_5 = arith.constant 0 : index
    %6 = vector.load %arg4[%c0_4, %c0_5] : memref<8x64xf32, #tpu.memory_space<vmem>>, vector<8x64xf32>
    tpu.vector_store %arg4[%c0_4, %c0_5], %5 {strides = array<i32>} : memref<8x64xf32, #tpu.memory_space<vmem>>, vector<8x64xf32>,
    return
  }
  func.func @transform_0(%arg0: i32) -> i32 {
    %c0_i32 = arith.constant 0 : i32
    %c0_i32_0 = arith.constant 0 : i32
    return %c0_i32 : i32
  }
  func.func @transform_1(%arg0: i32) -> (i32, i32) {
    %c0_i32 = arith.constant 0 : i32
    %c0_i32_0 = arith.constant 0 : i32
    return %arg0, %c0_i32 : i32, i32
  }
  func.func @transform_2(%arg0: i32) -> (i32, i32) {
    %c0_i32 = arith.constant 0 : i32
    %c0_i32_0 = arith.constant 0 : i32
    %c0_i32_1 = arith.constant 0 : i32
    return %c0_i32, %c0_i32_0 : i32, i32
  }
  func.func @transform_3(%arg0: i32) -> (i32, i32) {
    %c0_i32 = arith.constant 0 : i32
    %c0_i32_0 = arith.constant 0 : i32
    return %arg0, %c0_i32 : i32, i32
  }
}

</mosaic_0001>

<llo_original>
// kernel: shared_bias_linear.1
$region0: #{shared_bias_linear.1}
  #allocation0 [shape = 'u32[]', space=smem, size = 0x4, offset = 0x4, fixed_abs, tag = 'smem constant byte address 0x4 - core index']
  #allocation1 [shape = 'u32[72,128]{1,0:T(1,128)}', space=vmem, size = 0x9000, scoped, tag = 'internal scratch']
  #allocation2 [shape = 'f32[1]{0:T(128)S(6)}', space=smem, size = 0x200, scoped, tag = 'scoped memory for shared_bias_linear.1']
  %s0 = inlined_call_operand.<no memory space> [shape: f32[1], index: 0, kind: input, shape index: {}]
  %s1 = inlined_call_operand.hbm [shape: f32[8,32], index: 1, kind: input, shape index: {}]
  %s2 = inlined_call_operand.hbm [shape: f32[32,64], index: 2, kind: input, shape index: {}]
  %s3 = inlined_call_operand.hbm [shape: f32[8,64], index: 3, kind: output, shape index: {}]
  %s4 = sld [smem:[#allocation0]]
  $region30: #{shared_bias_linear.1} parent=0
    _
  %s6 = ssub.s32 1, %s4
  %s7 = scalar_select 0, %s6, %s4
  %8 = sst [smem:[#allocation2]] %s0
  $region1: #{shared_bias_linear.1} parent=0
    #allocation3 [shape = 'u8[4096]{0}', space=vmem, size = 0x1000, scoped, tag = 'input window, operand 1, single buffered']
    #allocation4 [shape = 's32[1]{0}', space=sflag, size = 0x4, scoped, tag = 'scoped memory for shared_bias_linear.1']
    #allocation5 [shape = 's32[1]{0}', space=sflag, size = 0x4, scoped, tag = 'scoped memory for shared_bias_linear.1']
    #allocation6 [shape = 'u8[16384]{0}', space=vmem, size = 0x4000, scoped, tag = 'input window, operand 2, single buffered']
    #allocation7 [shape = 's32[1]{0}', space=sflag, size = 0x4, scoped, tag = 'scoped memory for shared_bias_linear.1']
    #allocation8 [shape = 'u8[4096]{0}', space=vmem, size = 0x1000, scoped, tag = 'output window, operand 0, single buffered']
    %9 = vsyncpa [#allocation4], 0
    %10 = vsyncpa [#allocation7], 0
    %11 = vsyncpa [#allocation5], 0
    // Predicated region
    $region2: #{shared_bias_linear.1} parent=1 // pred_check
      _
    $region3: #{shared_bias_linear.1} parent=1 // pred_check_branch
      %13 = sbr.rel (0) target = $region5
    $region4: #{shared_bias_linear.1} parent=1 // pred_region
      _
    $region5: #{shared_bias_linear.1} parent=1 // pred_fallthru
      _
    // Predicated region
    $region6: #{shared_bias_linear.1} parent=1 // pred_check
      _
    $region7: #{shared_bias_linear.1} parent=1 // pred_check_branch
      %15 = sbr.rel (0) target = $region9
    $region8: #{shared_bias_linear.1} parent=1 // pred_region
      %17 = vsyncadd [#allocation4], 0
      %s19 = sshll.u32 %s1, 4
      %s20 = int_to_ptr.hbm [resolvable:$true] %s19
      %s21 = sshll.u32 [#allocation3], 4
      %s22 = int_to_ptr.vmem [resolvable:$true] %s21
      %24 = dma.hbm_to_vmem [thread:$0]  %s20, 128, %s22, [#allocation4]
    $region9: #{shared_bias_linear.1} parent=1 // pred_fallthru
      _
    // Predicated region
    $region10: #{shared_bias_linear.1} parent=1 // pred_check
      _
    $region11: #{shared_bias_linear.1} parent=1 // pred_check_branch
      %26 = sbr.rel (0) target = $region13
    $region12: #{shared_bias_linear.1} parent=1 // pred_region
      %28 = vsyncadd [#allocation7], 0
      %s29 = sshll.u32 %s2, 4
      %s30 = int_to_ptr.hbm [resolvable:$true] %s29
      %s31 = sshll.u32 [#allocation6], 4
      %s32 = int_to_ptr.vmem [resolvable:$true] %s31
      %37 = dma.hbm_to_vmem [thread:$0]  %s30, 512, %s32, [#allocation7], 128, 128, 8
    $region13: #{shared_bias_linear.1} parent=1 // pred_fallthru
      _
    // Predicated region
    $region14: #{shared_bias_linear.1} parent=1 // pred_check
      _
    $region15: #{shared_bias_linear.1} parent=1 // pred_check_branch
      %39 = sbr.rel (0) target = $region17
    $region16: #{shared_bias_linear.1} parent=1 // pred_region
      %41 = dma.done [#allocation4], 128
    $region17: #{shared_bias_linear.1} parent=1 // pred_fallthru
      _
    // Predicated region
    $region18: #{shared_bias_linear.1} parent=1 // pred_check
      _
    $region19: #{shared_bias_linear.1} parent=1 // pred_check_branch
      %43 = sbr.rel (0) target = $region21
    $region20: #{shared_bias_linear.1} parent=1 // pred_region
      %45 = dma.done [#allocation7], 512
    $region21: #{shared_bias_linear.1} parent=1 // pred_fallthru
      _
    %v46 = vld [vmem:[#allocation3] sm:$0xff]
    %v47 = vld [vmem:[#allocation6] sm:$0xff]
    %v48 = vld [vmem:[#allocation6 + $0x8] sm:$0xff]
    %v49 = vld [vmem:[#allocation6 + $0x10] sm:$0xff]
    %v50 = vld [vmem:[#allocation6 + $0x18] sm:$0xff]
    %s51 = sld [smem:[#allocation2]]
    %v52 = vstv %s51
    %vm53 = vcmask 261120
    %v55 = vsel %vm53, %v46, 0
    %57 = vmatpush.msra.mxu0 0.0
    %58 = vmatpush.msra.mxu0 0.0
    %59 = vmatpush.msra.mxu0 0.0
    %60 = vmatpush.msra.mxu0 0.0
    %61 = vmatpush.msra.mxu0 0.0
    %62 = vmatpush.msra.mxu0 0.0
    %63 = vmatpush.msra.mxu0 0.0
    %64 = vmatpush.msra.mxu0 0.0
    %65 = vmatpush.msra.mxu0 0.0
    %66 = vmatpush.msra.mxu0 0.0
    %67 = vmatpush.msra.mxu0 0.0
    %68 = vmatpush.msra.mxu0 0.0
    %69 = vmatpush.msra.mxu0 %v50
    %70 = vmatpush.msra.mxu0 %v49
    %71 = vmatpush.msra.mxu0 %v48
    %72 = vmatpush.msra.mxu0 %v47
    %73 = vmatmul.f32.gmra.mxu0 %v55
    %v74 = vpop.f32.mrf.mxu0
    %v75 = vadd.f32 %v52, %v74
    %76 = vdwg.mxu0
    %vm77 = vcmask 523264
    %78 = vst.msk [vmem:[#allocation8] sm:$0xff] %vm77, %v75
    // Predicated region
    $region22: #{shared_bias_linear.1} parent=1 // pred_check
      _
    $region23: #{shared_bias_linear.1} parent=1 // pred_check_branch
      %80 = sbr.rel (0) target = $region25
    $region24: #{shared_bias_linear.1} parent=1 // pred_region
      %82 = vsyncadd [#allocation5], 0
      %s84 = sshll.u32 [#allocation8], 4
      %s85 = int_to_ptr.vmem [resolvable:$true] %s84
      %s86 = sshll.u32 %s3, 4
      %s87 = int_to_ptr.hbm [resolvable:$true] %s86
      %89 = dma.vmem_to_hbm [thread:$0]  %s85, 128, %s87, [#allocation5]
    $region25: #{shared_bias_linear.1} parent=1 // pred_fallthru
      _
    // Predicated region
    $region26: #{shared_bias_linear.1} parent=1 // pred_check
      _
    $region27: #{shared_bias_linear.1} parent=1 // pred_check_branch
      %91 = sbr.rel (0) target = $region29
    $region28: #{shared_bias_linear.1} parent=1 // pred_region
      %93 = dma.done [#allocation5], 128
    $region29: #{shared_bias_linear.1} parent=1 // pred_fallthru
      _
    %94 = vsyncpa [#allocation4], 1
    %95 = vsyncpa [#allocation7], 1
    %96 = vsyncpa [#allocation5], 1

</llo_original>
